<compile_context>
chip_gen: v6e
topology: v6e:2x2x1
jax: 0.10.0
libtpu: 0.0.40
codegen_flags: <defaults>
</compile_context>

<pallas_src>
import jax
import jax.numpy as jnp
from jax.experimental import pallas as pl
from jax.experimental.pallas import tpu as pltpu


def _pad8(n):
    return ((n + 7) // 8) * 8


def _pad_rows(x, rows):
    return jnp.pad(x, ((0, rows - x.shape[0]), (0, 0)))


def _tensorcores_per_chip():
    """2 on v7x (2 TCs/chip), else 1. Splitting the grid only pays off there."""
    try:
        d = jax.devices()[0]
        if d.platform != "tpu":
            return 1
        kind = d.device_kind.lower()
        return 2 if "v7" in kind else 1
    except Exception:
        return 1


def _pick_tile_b(B, num_tensorcores=1, cap=1024):
    """Largest multiple-of-8 divisor of B (<= cap).  Only on multi-TC chips do
    we force >= num_tensorcores balanced grid steps; on single-TC chips the
    grid is a serial loop, so extra steps are pure per-step overhead."""
    best = None
    for t in range(8, min(B, cap) + 1, 8):
        if B % t == 0:
            best = t
    if best is None:
        return B  # B < 8 or no multiple-of-8 divisor: single full-batch tile
    if num_tensorcores > 1:
        while (B // best) < num_tensorcores and best % 16 == 0:
            best //= 2
    return best


def _make_generation_kernel(w_dim, n_classes, hidden, nh, offs):
    """Kernel factory: shape constants / packed-buffer offsets are static."""
    a_w1, a_b1, a_e, b_w2v1, b_b2v1, b_bv1, c_v2, c_bv2 = offs

    def kernel(w_ref, c_ref, ca_ref, cb_ref, cc_ref, v_ref):
        w = w_ref[...]                                   # (tb, w_dim)     f32
        c = c_ref[...]                                   # (tb, n_classes) f32

        # Static, 8-row-aligned views into the packed constant buffers.
        w1 = ca_ref[pl.ds(a_w1, w_dim), :]               # (w_dim, nh)
        b1 = ca_ref[pl.ds(a_b1, 1), :]                   # (1, nh)
        expand = ca_ref[pl.ds(a_e, n_classes), :]        # (n_classes, nh)
        w2v1 = cb_ref[pl.ds(b_w2v1, nh), :]              # (nh, hidden)
        b2v1 = cb_ref[pl.ds(b_b2v1, n_classes), :]       # (n_classes, hidden)
        bv1 = cb_ref[pl.ds(b_bv1, 1), :]                 # (1, hidden)
        v2 = cc_ref[pl.ds(c_v2, hidden), :]              # (hidden, v_pad)
        bv2 = cc_ref[pl.ds(c_bv2, 1), :]                 # (1, v_pad)

        # Fused first layer over all classes (lane-dense: nh = n_classes*hidden).
        hid = jnp.dot(w, w1, preferred_element_type=jnp.float32)
        hid = jnp.maximum(hid + b1, 0.0)

        # Mixture weights: one MXU expansion (c @ E) + one VPU multiply.
        scale = jnp.dot(c, expand, preferred_element_type=jnp.float32)
        hid = hid * scale

        # Second class layer folded into Pv_h_mean's first layer (exact algebra).
        hv = jnp.dot(hid, w2v1, preferred_element_type=jnp.float32)
        hv = hv + jnp.dot(c, b2v1, preferred_element_type=jnp.float32) + bv1
        hv = jnp.maximum(hv, 0.0)

        # Final layer; output width is padded to a multiple of 128 -> unmasked vst.
        v = jnp.dot(hv, v2, preferred_element_type=jnp.float32) + bv2
        v_ref[...] = v.astype(v_ref.dtype)

    return kernel


def generation_net_forward(w, c, params, *, tile_b=None):
    """Pallas wrapper: batch-tiled grid; class-fused, W2-folded, lane-dense."""
    B, w_dim = w.shape
    _, n_classes = c.shape
    W1, b1, W2, b2, V1, bv1, V2, bv2 = params
    hidden = W1.shape[2]
    h_dim = W2.shape[2]
    v_dim = V2.shape[1]
    nh = n_classes * hidden

    if tile_b is None:
        tile_b = _pick_tile_b(B, _tensorcores_per_chip())
    assert B % tile_b == 0

    # ---- constant prep (wrapper-side, once) --------------------------------
    f32 = jnp.float32
    W1_all = jnp.transpose(W1, (1, 0, 2)).reshape(w_dim, nh).astype(f32)
    b1_all = b1.reshape(1, nh).astype(f32)
    expand = jnp.repeat(jnp.eye(n_classes, dtype=f32), hidden, axis=1)  # (nc, nh)

    # Fold W2 (stacked over classes) and the mixture bias into V1: exact algebra.
    W2_stk = W2.reshape(nh, h_dim).astype(f32)
    W2V1 = W2_stk @ V1.astype(f32)                       # (nh, hidden)
    b2V1 = b2.astype(f32) @ V1.astype(f32)               # (n_classes, hidden)
    bv1_r = bv1.reshape(1, hidden).astype(f32)

    # Lane-pad the output features; padded weight columns are zero -> exact.
    v_pad = max(128, _pad8(v_dim) if v_dim % 128 == 0 else ((v_dim + 127) // 128) * 128)
    V2_p = jnp.pad(V2.astype(f32), ((0, 0), (0, v_pad - v_dim)))
    bv2_p = jnp.pad(bv2.reshape(1, v_dim).astype(f32), ((0, 0), (0, v_pad - v_dim)))

    # Pack constants into 3 buffers grouped by lane width; each segment is
    # padded to an 8-row boundary so in-kernel static slices are sublane-aligned.
    rA = (_pad8(w_dim), 8, _pad8(n_classes))
    constA = jnp.concatenate(
        [_pad_rows(W1_all, rA[0]), _pad_rows(b1_all, rA[1]), _pad_rows(expand, rA[2])],
        axis=0)                                          # (sum rA, nh)
    a_w1, a_b1, a_e = 0, rA[0], rA[0] + rA[1]

    rB = (_pad8(nh), _pad8(n_classes), 8)
    constB = jnp.concatenate(
        [_pad_rows(W2V1, rB[0]), _pad_rows(b2V1, rB[1]), _pad_rows(bv1_r, rB[2])],
        axis=0)                                          # (sum rB, hidden)
    b_w2v1, b_b2v1, b_bv1 = 0, rB[0], rB[0] + rB[1]

    rC = (_pad8(hidden), 8)
    constC = jnp.concatenate(
        [_pad_rows(V2_p, rC[0]), _pad_rows(bv2_p, rC[1])], axis=0)  # (sum rC, v_pad)
    c_v2, c_bv2 = 0, rC[0]

    offs = (a_w1, a_b1, a_e, b_w2v1, b_b2v1, b_bv1, c_v2, c_bv2)
    kernel = _make_generation_kernel(w_dim, n_classes, hidden, nh, offs)

    grid = (B // tile_b,)
    full = lambda arr: pl.BlockSpec(arr.shape, lambda i: (0,) * arr.ndim)

    out_padded = pl.pallas_call(
        kernel,
        out_shape=jax.ShapeDtypeStruct((B, v_pad), jnp.float32),
        grid_spec=pltpu.PrefetchScalarGridSpec(
            num_scalar_prefetch=0,
            grid=grid,
            in_specs=[
                pl.BlockSpec((tile_b, w_dim), lambda i: (i, 0)),
                pl.BlockSpec((tile_b, n_classes), lambda i: (i, 0)),
                full(constA),
                full(constB),
                full(constC),
            ],
            out_specs=pl.BlockSpec((tile_b, v_pad), lambda i: (i, 0)),
        ),
        compiler_params=pltpu.CompilerParams(
            dimension_semantics=("parallel",)),
    )(w, c, constA, constB, constC)

    return out_padded[:, :v_dim]


def init_params(key, w_dim, h_dim, v_dim, n_classes, hidden=32):
    """Deterministic synthetic parameters (Linear weights stored as (in, out))."""
    ks = jax.random.split(key, 8)
    u = lambda k, shape, fan_in: jax.random.uniform(
        k, shape, jnp.float32, -1.0 / jnp.sqrt(fan_in), 1.0 / jnp.sqrt(fan_in))
    W1 = u(ks[0], (n_classes, w_dim, hidden), w_dim)
    b1 = u(ks[1], (n_classes, hidden), w_dim)
    W2 = u(ks[2], (n_classes, hidden, h_dim), hidden)
    b2 = u(ks[3], (n_classes, h_dim), hidden)
    V1 = u(ks[4], (h_dim, hidden), h_dim)
    bv1 = u(ks[5], (1, hidden), h_dim)
    V2 = u(ks[6], (hidden, v_dim), hidden)
    bv2 = u(ks[7], (1, v_dim), hidden)
    return W1, b1, W2, b2, V1, bv1, V2, bv2


def reference_forward(w, c, params):
    """Pure-JAX reference mirroring the PyTorch forward (per-class loop)."""
    W1, b1, W2, b2, V1, bv1, V2, bv2 = params
    n_classes = c.shape[-1]
    h = None
    for i in range(n_classes):
        hid = jnp.maximum(w @ W1[i] + b1[i], 0.0)
        h_i = hid @ W2[i] + b2[i]
        term = c[:, i:i + 1] * h_i
        h = term if h is None else h + term
    hv = jnp.maximum(h @ V1 + bv1, 0.0)
    return hv @ V2 + bv2


if __name__ == "__main__":
    # Small, forward-consistent shapes.
    B, w_dim, h_dim, v_dim, n_classes, hidden = 16, 16, 8, 16, 4, 32

    key = jax.random.PRNGKey(0)
    k_w, k_c, k_p = jax.random.split(key, 3)

    w = jax.random.normal(k_w, (B, w_dim), jnp.float32)
    logits = jax.random.normal(k_c, (B, n_classes), jnp.float32)
    c = jax.nn.softmax(logits, axis=-1)  # class probabilities, as in the GMVAE

    params = init_params(k_p, w_dim, h_dim, v_dim, n_classes, hidden)

    v = generation_net_forward(w, c, params)
    v = jax.block_until_ready(v)

    v_ref = reference_forward(w, c, params)
    assert v.shape == (B, v_dim)
    # Slightly relaxed tolerance: folding W2 into V1 reassociates f32 sums.
    assert jnp.allclose(v, v_ref, atol=1e-4, rtol=1e-4), "mismatch vs reference"

    print("KERNEL_OK")
</pallas_src>

<mosaic_0001>
module attributes {stable_mosaic.version = 11 : i64} {
  func.func @kernel(%arg0: i32, %arg1: memref<16x16xf32, #tpu.memory_space<vmem>>, %arg2: memref<16x4xf32, #tpu.memory_space<vmem>>, %arg3: memref<32x128xf32, #tpu.memory_space<vmem>>, %arg4: memref<144x32xf32, #tpu.memory_space<vmem>>, %arg5: memref<40x128xf32, #tpu.memory_space<vmem>>, %arg6: memref<16x128xf32, #tpu.memory_space<vmem>>) attributes {dimension_semantics = [#tpu.dimension_semantics<parallel>], iteration_bounds = array<i64: 1>, scalar_prefetch = 0 : i64, scratch_operands = 0 : i64, tpu.core_type = #tpu.core_type<tc>, window_params = [{transform_indices = @transform_0, window_bounds = array<i64: 16, 16>}, {transform_indices = @transform_1, window_bounds = array<i64: 16, 4>}, {pipeline_mode = #tpu.pipeline_mode<synchronous>, transform_indices = @transform_2, window_bounds = array<i64: 32, 128>}, {pipeline_mode = #tpu.pipeline_mode<synchronous>, transform_indices = @transform_3, window_bounds = array<i64: 144, 32>}, {pipeline_mode = #tpu.pipeline_mode<synchronous>, transform_indices = @transform_4, window_bounds = array<i64: 40, 128>}, {transform_indices = @transform_5, window_bounds = array<i64: 16, 128>}]} {
    %c0 = arith.constant 0 : index
    %c0_0 = arith.constant 0 : index
    %0 = vector.load %arg1[%c0, %c0_0] : memref<16x16xf32, #tpu.memory_space<vmem>>, vector<16x16xf32>
    %c0_1 = arith.constant 0 : index
    %c0_2 = arith.constant 0 : index
    %1 = vector.load %arg2[%c0_1, %c0_2] : memref<16x4xf32, #tpu.memory_space<vmem>>, vector<16x4xf32>
    %c0_3 = arith.constant 0 : index
    %c0_4 = arith.constant 0 : index
    %2 = vector.load %arg3[%c0_3, %c0_4] : memref<32x128xf32, #tpu.memory_space<vmem>>, vector<16x128xf32>
    %c16 = arith.constant 16 : index
    %c0_5 = arith.constant 0 : index
    %3 = vector.load %arg3[%c16, %c0_5] : memref<32x128xf32, #tpu.memory_space<vmem>>, vector<1x128xf32>
    %c24 = arith.constant 24 : index
    %c0_6 = arith.constant 0 : index
    %4 = vector.load %arg3[%c24, %c0_6] : memref<32x128xf32, #tpu.memory_space<vmem>>, vector<4x128xf32>
    %c0_7 = arith.constant 0 : index
    %c0_8 = arith.constant 0 : index
    %5 = vector.load %arg4[%c0_7, %c0_8] : memref<144x32xf32, #tpu.memory_space<vmem>>, vector<128x32xf32>
    %c128 = arith.constant 128 : index
    %c0_9 = arith.constant 0 : index
    %6 = vector.load %arg4[%c128, %c0_9] : memref<144x32xf32, #tpu.memory_space<vmem>>, vector<4x32xf32>
    %c136 = arith.constant 136 : index
    %c0_10 = arith.constant 0 : index
    %7 = vector.load %arg4[%c136, %c0_10] : memref<144x32xf32, #tpu.memory_space<vmem>>, vector<1x32xf32>
    %c0_11 = arith.constant 0 : index
    %c0_12 = arith.constant 0 : index
    %8 = vector.load %arg5[%c0_11, %c0_12] : memref<40x128xf32, #tpu.memory_space<vmem>>, vector<32x128xf32>
    %c32 = arith.constant 32 : index
    %c0_13 = arith.constant 0 : index
    %9 = vector.load %arg5[%c32, %c0_13] : memref<40x128xf32, #tpu.memory_space<vmem>>, vector<1x128xf32>
    %cst = arith.constant dense<0.000000e+00> : vector<16x128xf32>
    %10 = tpu.matmul %0, %2, %cst {dimension_numbers = #tpu.dot_dimension_numbers<[1], [0], [0], [1], [0, 0, 1, 1], [], []>} : vector<16x16xf32>, vector<16x128xf32>, vector<16x128xf32> -> vector<16x128xf32>
    %11 = vector.broadcast %3 : vector<1x128xf32> to vector<16x128xf32>
    %12 = arith.addf %10, %11 : vector<16x128xf32>
    %cst_14 = arith.constant 0.000000e+00 : f32
    %13 = vector.broadcast %cst_14 : f32 to vector<16x128xf32>
    %14 = arith.maximumf %12, %13 : vector<16x128xf32>
    %cst_15 = arith.constant dense<0.000000e+00> : vector<16x128xf32>
    %15 = tpu.matmul %1, %4, %cst_15 {dimension_numbers = #tpu.dot_dimension_numbers<[1], [0], [0], [1], [0, 0, 1, 1], [], []>} : vector<16x4xf32>, vector<4x128xf32>, vector<16x128xf32> -> vector<16x128xf32>
    %16 = arith.mulf %14, %15 : vector<16x128xf32>
    %cst_16 = arith.constant dense<0.000000e+00> : vector<16x32xf32>
    %17 = tpu.matmul %16, %5, %cst_16 {dimension_numbers = #tpu.dot_dimension_numbers<[1], [0], [0], [1], [0, 0, 1, 1], [], []>} : vector<16x128xf32>, vector<128x32xf32>, vector<16x32xf32> -> vector<16x32xf32>
    %cst_17 = arith.constant dense<0.000000e+00> : vector<16x32xf32>
    %18 = tpu.matmul %1, %6, %cst_17 {dimension_numbers = #tpu.dot_dimension_numbers<[1], [0], [0], [1], [0, 0, 1, 1], [], []>} : vector<16x4xf32>, vector<4x32xf32>, vector<16x32xf32> -> vector<16x32xf32>
    %19 = arith.addf %17, %18 : vector<16x32xf32>
    %20 = vector.broadcast %7 : vector<1x32xf32> to vector<16x32xf32>
    %21 = arith.addf %19, %20 : vector<16x32xf32>
    %cst_18 = arith.constant 0.000000e+00 : f32
    %22 = vector.broadcast %cst_18 : f32 to vector<16x32xf32>
    %23 = arith.maximumf %21, %22 : vector<16x32xf32>
    %cst_19 = arith.constant dense<0.000000e+00> : vector<16x128xf32>
    %24 = tpu.matmul %23, %8, %cst_19 {dimension_numbers = #tpu.dot_dimension_numbers<[1], [0], [0], [1], [0, 0, 1, 1], [], []>} : vector<16x32xf32>, vector<32x128xf32>, vector<16x128xf32> -> vector<16x128xf32>
    %25 = vector.broadcast %9 : vector<1x128xf32> to vector<16x128xf32>
    %26 = arith.addf %24, %25 : vector<16x128xf32>
    %c0_20 = arith.constant 0 : index
    %c0_21 = arith.constant 0 : index
    %27 = vector.load %arg6[%c0_20, %c0_21] : memref<16x128xf32, #tpu.memory_space<vmem>>, vector<16x128xf32>
    tpu.vector_store %arg6[%c0_20, %c0_21], %26 {strides = array<i32>} : memref<16x128xf32, #tpu.memory_space<vmem>>, vector<16x128xf32>,
    return
  }
  func.func @transform_0(%arg0: i32) -> (i32, i32) {
    %c0_i32 = arith.constant 0 : i32
    %c0_i32_0 = arith.constant 0 : i32
    return %arg0, %c0_i32 : i32, i32
  }
  func.func @transform_1(%arg0: i32) -> (i32, i32) {
    %c0_i32 = arith.constant 0 : i32
    %c0_i32_0 = arith.constant 0 : i32
    return %arg0, %c0_i32 : i32, i32
  }
  func.func @transform_2(%arg0: i32) -> (i32, i32) {
    %c0_i32 = arith.constant 0 : i32
    %c0_i32_0 = arith.constant 0 : i32
    %c0_i32_1 = arith.constant 0 : i32
    return %c0_i32, %c0_i32_0 : i32, i32
  }
  func.func @transform_3(%arg0: i32) -> (i32, i32) {
    %c0_i32 = arith.constant 0 : i32
    %c0_i32_0 = arith.constant 0 : i32
    %c0_i32_1 = arith.constant 0 : i32
    return %c0_i32, %c0_i32_0 : i32, i32
  }
  func.func @transform_4(%arg0: i32) -> (i32, i32) {
    %c0_i32 = arith.constant 0 : i32
    %c0_i32_0 = arith.constant 0 : i32
    %c0_i32_1 = arith.constant 0 : i32
    return %c0_i32, %c0_i32_0 : i32, i32
  }
  func.func @transform_5(%arg0: i32) -> (i32, i32) {
    %c0_i32 = arith.constant 0 : i32
    %c0_i32_0 = arith.constant 0 : i32
    return %arg0, %c0_i32 : i32, i32
  }
}

</mosaic_0001>

<llo_original>
// kernel: tpu_custom_call.1
$region0: #{tpu_custom_call.1}
  #allocation0 [shape = 'u32[]', space=smem, size = 0x4, offset = 0x4, fixed_abs, tag = 'smem constant byte address 0x4 - core index']
  #allocation1 [shape = 'u32[144,128]{1,0:T(1,128)}', space=vmem, size = 0x12000, scoped, tag = 'internal scratch']
  %s0 = inlined_call_operand.vmem [shape: f32[16,16], index: 0, kind: input, shape index: {}]
  %s1 = inlined_call_operand.vmem [shape: f32[16,4], index: 1, kind: input, shape index: {}]
  %s2 = inlined_call_operand.vmem [shape: f32[32,128], index: 2, kind: input, shape index: {}]
  %s3 = inlined_call_operand.vmem [shape: f32[144,32], index: 3, kind: input, shape index: {}]
  %s4 = inlined_call_operand.vmem [shape: f32[40,128], index: 4, kind: input, shape index: {}]
  %s5 = inlined_call_operand.hbm [shape: f32[16,128], index: 5, kind: output, shape index: {}]
  %s6 = sld [smem:[#allocation0]]
  $region30: #{tpu_custom_call.1} parent=0
    _
  %s8 = ssub.s32 1, %s6
  %s9 = scalar_select 0, %s8, %s6
  $region1: #{tpu_custom_call.1} parent=0
    #allocation2 [shape = 'u8[8192]{0}', space=vmem, size = 0x2000, scoped, tag = 'output window, operand 0, single buffered']
    #allocation3 [shape = 's32[1]{0}', space=sflag, size = 0x4, scoped, tag = 'scoped memory for tpu_custom_call.1']
    %10 = vsyncpa [#allocation3], 0
    // Predicated region
    $region2: #{tpu_custom_call.1} parent=1 // pred_check
      _
    $region3: #{tpu_custom_call.1} parent=1 // pred_check_branch
      %12 = sbr.rel (0) target = $region5
    $region4: #{tpu_custom_call.1} parent=1 // pred_region
      _
    $region5: #{tpu_custom_call.1} parent=1 // pred_fallthru
      _
    // Predicated region
    $region6: #{tpu_custom_call.1} parent=1 // pred_check
      _
    $region7: #{tpu_custom_call.1} parent=1 // pred_check_branch
      %14 = sbr.rel (0) target = $region9
    $region8: #{tpu_custom_call.1} parent=1 // pred_region
      _
    $region9: #{tpu_custom_call.1} parent=1 // pred_fallthru
      _
    // Predicated region
    $region10: #{tpu_custom_call.1} parent=1 // pred_check
      _
    $region11: #{tpu_custom_call.1} parent=1 // pred_check_branch
      %16 = sbr.rel (0) target = $region13
    $region12: #{tpu_custom_call.1} parent=1 // pred_region
      _
    $region13: #{tpu_custom_call.1} parent=1 // pred_fallthru
      _
    // Predicated region
    $region14: #{tpu_custom_call.1} parent=1 // pred_check
      _
    $region15: #{tpu_custom_call.1} parent=1 // pred_check_branch
      %18 = sbr.rel (0) target = $region17
    $region16: #{tpu_custom_call.1} parent=1 // pred_region
      _
    $region17: #{tpu_custom_call.1} parent=1 // pred_fallthru
      _
    // Predicated region
    $region18: #{tpu_custom_call.1} parent=1 // pred_check
      _
    $region19: #{tpu_custom_call.1} parent=1 // pred_check_branch
      %20 = sbr.rel (0) target = $region21
    $region20: #{tpu_custom_call.1} parent=1 // pred_region
      _
    $region21: #{tpu_custom_call.1} parent=1 // pred_fallthru
      _
    %v21 = vld [vmem:[%s0] sm:$0xff]
    %v22 = vld [vmem:[%s0 + $0x8] sm:$0xff]
    %v23 = vld [vmem:[%s1] sm:$0xff]
    %v24 = vld [vmem:[%s1 + $0x8] sm:$0xff]
    %v25 = vld [vmem:[%s2] sm:$0xff]
    %v26 = vld [vmem:[%s2 + $0x8] sm:$0xff]
    %v27 = vld [vmem:[%s2 + $0x10] sm:$0x1]
    %v28 = vld [vmem:[%s2 + $0x18] sm:$0xf]
    %v29 = vld [vmem:[%s3] sm:$0xff]
    %v30 = vld [vmem:[%s3 + $0x8] sm:$0xff]
    %v31 = vld [vmem:[%s3 + $0x10] sm:$0xff]
    %v32 = vld [vmem:[%s3 + $0x18] sm:$0xff]
    %v33 = vld [vmem:[%s3 + $0x20] sm:$0xff]
    %v34 = vld [vmem:[%s3 + $0x28] sm:$0xff]
    %v35 = vld [vmem:[%s3 + $0x30] sm:$0xff]
    %v36 = vld [vmem:[%s3 + $0x38] sm:$0xff]
    %v37 = vld [vmem:[%s3 + $0x40] sm:$0xff]
    %v38 = vld [vmem:[%s3 + $0x48] sm:$0xff]
    %v39 = vld [vmem:[%s3 + $0x50] sm:$0xff]
    %v40 = vld [vmem:[%s3 + $0x58] sm:$0xff]
    %v41 = vld [vmem:[%s3 + $0x60] sm:$0xff]
    %v42 = vld [vmem:[%s3 + $0x68] sm:$0xff]
    %v43 = vld [vmem:[%s3 + $0x70] sm:$0xff]
    %v44 = vld [vmem:[%s3 + $0x78] sm:$0xff]
    %v45 = vld [vmem:[%s3 + $0x80] sm:$0xf]
    %v46 = vld [vmem:[%s3 + $0x88] sm:$0x1]
    %v47 = vld [vmem:[%s4] sm:$0xff]
    %v48 = vld [vmem:[%s4 + $0x8] sm:$0xff]
    %v49 = vld [vmem:[%s4 + $0x10] sm:$0xff]
    %v50 = vld [vmem:[%s4 + $0x18] sm:$0xff]
    %v51 = vld [vmem:[%s4 + $0x20] sm:$0x1]
    %v52 = vlaneseq
    %v53 = vshrl.u32 %v52, 7
    %v54 = vsub.s32 0, %v53
    %v55 = vrot.slane %v27, %v54
    %vm56 = vcmask 130048
    %v58 = vsel %vm56, %v21, 0
    %v61 = vsel %vm56, %v22, 0
    %63 = vmatprep.subr.mxu0 0.0
    %64 = vmatpush1.msra.mxu0 0.0
    %65 = vmatprep.subr.mxu0 0.0
    %66 = vmatpush1.msra.mxu0 0.0
    %67 = vmatprep.subr.mxu0 0.0
    %68 = vmatpush1.msra.mxu0 0.0
    %69 = vmatprep.subr.mxu0 0.0
    %70 = vmatpush1.msra.mxu0 0.0
    %71 = vmatprep.subr.mxu0 0.0
    %72 = vmatpush1.msra.mxu0 0.0
    %73 = vmatprep.subr.mxu0 0.0
    %74 = vmatpush1.msra.mxu0 0.0
    %75 = vmatprep.subr.mxu0 0.0
    %76 = vmatpush1.msra.mxu0 0.0
    %77 = vmatprep.subr.mxu0 0.0
    %78 = vmatpush1.msra.mxu0 0.0
    %79 = vmatprep.subr.mxu0 0.0
    %80 = vmatpush1.msra.mxu0 0.0
    %81 = vmatprep.subr.mxu0 0.0
    %82 = vmatpush1.msra.mxu0 0.0
    %83 = vmatprep.subr.mxu0 0.0
    %84 = vmatpush1.msra.mxu0 0.0
    %85 = vmatprep.subr.mxu0 0.0
    %86 = vmatpush1.msra.mxu0 0.0
    %87 = vmatprep.subr.mxu0 0.0
    %88 = vmatpush1.msra.mxu0 0.0
    %89 = vmatprep.subr.mxu0 0.0
    %90 = vmatpush1.msra.mxu0 0.0
    %91 = vmatprep.subr.mxu0 0.0
    %92 = vmatpush1.msra.mxu0 %v26
    %93 = vmatprep.subr.mxu0 0.0
    %94 = vmatpush1.msra.mxu0 %v25
    %95 = vmatprep.subr.mxu0 0.0
    %96 = vmatpush2.msra.mxu0 0.0
    %97 = vmatprep.subr.mxu0 0.0
    %98 = vmatpush2.msra.mxu0 0.0
    %99 = vmatprep.subr.mxu0 0.0
    %100 = vmatpush2.msra.mxu0 0.0
    %101 = vmatprep.subr.mxu0 0.0
    %102 = vmatpush2.msra.mxu0 0.0
    %103 = vmatprep.subr.mxu0 0.0
    %104 = vmatpush2.msra.mxu0 0.0
    %105 = vmatprep.subr.mxu0 0.0
    %106 = vmatpush2.msra.mxu0 0.0
    %107 = vmatprep.subr.mxu0 0.0
    %108 = vmatpush2.msra.mxu0 0.0
    %109 = vmatprep.subr.mxu0 0.0
    %110 = vmatpush2.msra.mxu0 0.0
    %111 = vmatprep.subr.mxu0 0.0
    %112 = vmatpush2.msra.mxu0 0.0
    %113 = vmatprep.subr.mxu0 0.0
    %114 = vmatpush2.msra.mxu0 0.0
    %115 = vmatprep.subr.mxu0 0.0
    %116 = vmatpush2.msra.mxu0 0.0
    %117 = vmatprep.subr.mxu0 0.0
    %118 = vmatpush2.msra.mxu0 0.0
    %119 = vmatprep.subr.mxu0 0.0
    %120 = vmatpush2.msra.mxu0 0.0
    %121 = vmatprep.subr.mxu0 0.0
    %122 = vmatpush2.msra.mxu0 0.0
    %123 = vmatprep.subr.mxu0 0.0
    %124 = vmatpush2.msra.mxu0 0.0
    %125 = vmatprep.subr.mxu0 0.0
    %126 = vmatpush2.msra.mxu0 0.0
    %127 = vmatprep.mubr.f32.mxu0 0.0
    %128 = vmatmul.mubr.f32.gmra.mxu0 %v58
    %v129 = vpop.f32.mrf.mxu0
    %v130 = vadd.f32 %v55, %v129
    %v131 = vpop.f32.mrf.mxu0
    %132 = vmatprep.mubr.f32.mxu0 0.0
    %133 = vmatmul.mubr.f32.gmra.mxu0 %v61
    %v134 = vpop.f32.mrf.mxu0
    %v135 = vadd.f32 %v55, %v134
    %v136 = vpop.f32.mrf.mxu0
    %137 = vdwg.mxu0
    %v138 = vmax.f32 %v130, 0.0
    %v139 = vmax.f32 %v135, 0.0
    %vm140 = vcmask 31744
    %v142 = vsel %vm140, %v23, 0
    %v145 = vsel %vm140, %v24, 0
    %vm147 = vcmask 1043456
    %v149 = vsel %vm147, %v28, 0
    %151 = vmatprep.subr.mxu0 0.0
    %152 = vmatpush1.msra.mxu0 0.0
    %153 = vmatprep.subr.mxu0 0.0
    %154 = vmatpush1.msra.mxu0 0.0
    %155 = vmatprep.subr.mxu0 0.0
    %156 = vmatpush1.msra.mxu0 0.0
    %157 = vmatprep.subr.mxu0 0.0
    %158 = vmatpush1.msra.mxu0 0.0
    %159 = vmatprep.subr.mxu0 0.0
    %160 = vmatpush1.msra.mxu0 0.0
    %161 = vmatprep.subr.mxu0 0.0
    %162 = vmatpush1.msra.mxu0 0.0
    %163 = vmatprep.subr.mxu0 0.0
    %164 = vmatpush1.msra.mxu0 0.0
    %165 = vmatprep.subr.mxu0 0.0
    %166 = vmatpush1.msra.mxu0 0.0
    %167 = vmatprep.subr.mxu0 0.0
    %168 = vmatpush1.msra.mxu0 0.0
    %169 = vmatprep.subr.mxu0 0.0
    %170 = vmatpush1.msra.mxu0 0.0
    %171 = vmatprep.subr.mxu0 0.0
    %172 = vmatpush1.msra.mxu0 0.0
    %173 = vmatprep.subr.mxu0 0.0
    %174 = vmatpush1.msra.mxu0 0.0
    %175 = vmatprep.subr.mxu0 0.0
    %176 = vmatpush1.msra.mxu0 0.0
    %177 = vmatprep.subr.mxu0 0.0
    %178 = vmatpush1.msra.mxu0 0.0
    %179 = vmatprep.subr.mxu0 0.0
    %180 = vmatpush1.msra.mxu0 0.0
    %181 = vmatprep.subr.mxu0 0.0
    %182 = vmatpush1.msra.mxu0 %v149
    %183 = vmatprep.subr.mxu0 0.0
    %184 = vmatpush2.msra.mxu0 0.0
    %185 = vmatprep.subr.mxu0 0.0
    %186 = vmatpush2.msra.mxu0 0.0
    %187 = vmatprep.subr.mxu0 0.0
    %188 = vmatpush2.msra.mxu0 0.0
    %189 = vmatprep.subr.mxu0 0.0
    %190 = vmatpush2.msra.mxu0 0.0
    %191 = vmatprep.subr.mxu0 0.0
    %192 = vmatpush2.msra.mxu0 0.0
    %193 = vmatprep.subr.mxu0 0.0
    %194 = vmatpush2.msra.mxu0 0.0
    %195 = vmatprep.subr.mxu0 0.0
    %196 = vmatpush2.msra.mxu0 0.0
    %197 = vmatprep.subr.mxu0 0.0
    %198 = vmatpush2.msra.mxu0 0.0
    %199 = vmatprep.subr.mxu0 0.0
    %200 = vmatpush2.msra.mxu0 0.0
    %201 = vmatprep.subr.mxu0 0.0
    %202 = vmatpush2.msra.mxu0 0.0
    %203 = vmatprep.subr.mxu0 0.0
    %204 = vmatpush2.msra.mxu0 0.0
    %205 = vmatprep.subr.mxu0 0.0
    %206 = vmatpush2.msra.mxu0 0.0
    %207 = vmatprep.subr.mxu0 0.0
    %208 = vmatpush2.msra.mxu0 0.0
    %209 = vmatprep.subr.mxu0 0.0
    %210 = vmatpush2.msra.mxu0 0.0
    %211 = vmatprep.subr.mxu0 0.0
    %212 = vmatpush2.msra.mxu0 0.0
    %213 = vmatprep.subr.mxu0 0.0
    %214 = vmatpush2.msra.mxu0 0.0
    %215 = vmatprep.mubr.f32.mxu0 0.0
    %216 = vmatmul.mubr.f32.gmra.mxu0 %v142
    %v217 = vpop.f32.mrf.mxu0
    %v218 = vadd.f32 0.0, %v217
    %v219 = vpop.f32.mrf.mxu0
    %220 = vmatprep.mubr.f32.mxu0 0.0
    %221 = vmatmul.mubr.f32.gmra.mxu0 %v145
    %v222 = vpop.f32.mrf.mxu0
    %v223 = vadd.f32 0.0, %v222
    %v224 = vpop.f32.mrf.mxu0
    %225 = vdwg.mxu0
    %v226 = vmul.f32 %v138, %v218
    %v227 = vmul.f32 %v139, %v223
    %v229 = vsel %vm147, %v45, 0
    %231 = vmatprep.subr.mxu0 0.0
    %232 = vmatpush1.msra.mxu0 0.0
    %233 = vmatprep.subr.mxu0 0.0
    %234 = vmatpush1.msra.mxu0 0.0
    %235 = vmatprep.subr.mxu0 0.0
    %236 = vmatpush1.msra.mxu0 0.0
    %237 = vmatprep.subr.mxu0 0.0
    %238 = vmatpush1.msra.mxu0 0.0
    %239 = vmatprep.subr.mxu0 0.0
    %240 = vmatpush1.msra.mxu0 0.0
    %241 = vmatprep.subr.mxu0 0.0
    %242 = vmatpush1.msra.mxu0 0.0
    %243 = vmatprep.subr.mxu0 0.0
    %244 = vmatpush1.msra.mxu0 0.0
    %245 = vmatprep.subr.mxu0 0.0
    %246 = vmatpush1.msra.mxu0 0.0
    %247 = vmatprep.subr.mxu0 0.0
    %248 = vmatpush1.msra.mxu0 0.0
    %249 = vmatprep.subr.mxu0 0.0
    %250 = vmatpush1.msra.mxu0 0.0
    %251 = vmatprep.subr.mxu0 0.0
    %252 = vmatpush1.msra.mxu0 0.0
    %253 = vmatprep.subr.mxu0 0.0
    %254 = vmatpush1.msra.mxu0 0.0
    %255 = vmatprep.subr.mxu0 0.0
    %256 = vmatpush1.msra.mxu0 0.0
    %257 = vmatprep.subr.mxu0 0.0
    %258 = vmatpush1.msra.mxu0 0.0
    %259 = vmatprep.subr.mxu0 0.0
    %260 = vmatpush1.msra.mxu0 0.0
    %261 = vmatprep.subr.mxu0 0.0
    %262 = vmatpush1.msra.mxu0 %v229
    %263 = vmatprep.subr.mxu0 0.0
    %264 = vmatpush2.msra.mxu0 0.0
    %265 = vmatprep.subr.mxu0 0.0
    %266 = vmatpush2.msra.mxu0 0.0
    %267 = vmatprep.subr.mxu0 0.0
    %268 = vmatpush2.msra.mxu0 0.0
    %269 = vmatprep.subr.mxu0 0.0
    %270 = vmatpush2.msra.mxu0 0.0
    %271 = vmatprep.subr.mxu0 0.0
    %272 = vmatpush2.msra.mxu0 0.0
    %273 = vmatprep.subr.mxu0 0.0
    %274 = vmatpush2.msra.mxu0 0.0
    %275 = vmatprep.subr.mxu0 0.0
    %276 = vmatpush2.msra.mxu0 0.0
    %277 = vmatprep.subr.mxu0 0.0
    %278 = vmatpush2.msra.mxu0 0.0
    %279 = vmatprep.subr.mxu0 0.0
    %280 = vmatpush2.msra.mxu0 0.0
    %281 = vmatprep.subr.mxu0 0.0
    %282 = vmatpush2.msra.mxu0 0.0
    %283 = vmatprep.subr.mxu0 0.0
    %284 = vmatpush2.msra.mxu0 0.0
    %285 = vmatprep.subr.mxu0 0.0
    %286 = vmatpush2.msra.mxu0 0.0
    %287 = vmatprep.subr.mxu0 0.0
    %288 = vmatpush2.msra.mxu0 0.0
    %289 = vmatprep.subr.mxu0 0.0
    %290 = vmatpush2.msra.mxu0 0.0
    %291 = vmatprep.subr.mxu0 0.0
    %292 = vmatpush2.msra.mxu0 0.0
    %293 = vmatprep.subr.mxu0 0.0
    %294 = vmatpush2.msra.mxu0 0.0
    %295 = vmatprep.mubr.f32.mxu0 0.0
    %296 = vmatmul.mubr.f32.gmra.mxu0 %v142
    %v297 = vpop.f32.mrf.mxu0
    %v298 = vadd.f32 0.0, %v297
    %v299 = vpop.f32.mrf.mxu0
    %300 = vmatprep.mubr.f32.mxu0 0.0
    %301 = vmatmul.mubr.f32.gmra.mxu0 %v145
    %v302 = vpop.f32.mrf.mxu0
    %v303 = vadd.f32 0.0, %v302
    %v304 = vpop.f32.mrf.mxu0
    %305 = vdwg.mxu0
    %306 = vmatprep.subr.mxu0 0.0
    %307 = vmatpush1.msra.mxu0 %v44
    %308 = vmatprep.subr.mxu0 0.0
    %309 = vmatpush1.msra.mxu0 %v43
    %310 = vmatprep.subr.mxu0 0.0
    %311 = vmatpush1.msra.mxu0 %v42
    %312 = vmatprep.subr.mxu0 0.0
    %313 = vmatpush1.msra.mxu0 %v41
    %314 = vmatprep.subr.mxu0 0.0
    %315 = vmatpush1.msra.mxu0 %v40
    %316 = vmatprep.subr.mxu0 0.0
    %317 = vmatpush1.msra.mxu0 %v39
    %318 = vmatprep.subr.mxu0 0.0
    %319 = vmatpush1.msra.mxu0 %v38
    %320 = vmatprep.subr.mxu0 0.0
    %321 = vmatpush1.msra.mxu0 %v37
    %322 = vmatprep.subr.mxu0 0.0
    %323 = vmatpush1.msra.mxu0 %v36
    %324 = vmatprep.subr.mxu0 0.0
    %325 = vmatpush1.msra.mxu0 %v35
    %326 = vmatprep.subr.mxu0 0.0
    %327 = vmatpush1.msra.mxu0 %v34
    %328 = vmatprep.subr.mxu0 0.0
    %329 = vmatpush1.msra.mxu0 %v33
    %330 = vmatprep.subr.mxu0 0.0
    %331 = vmatpush1.msra.mxu0 %v32
    %332 = vmatprep.subr.mxu0 0.0
    %333 = vmatpush1.msra.mxu0 %v31
    %334 = vmatprep.subr.mxu0 0.0
    %335 = vmatpush1.msra.mxu0 %v30
    %336 = vmatprep.subr.mxu0 0.0
    %337 = vmatpush1.msra.mxu0 %v29
    %338 = vmatprep.subr.mxu0 0.0
    %339 = vmatpush2.msra.mxu0 0.0
    %340 = vmatprep.subr.mxu0 0.0
    %341 = vmatpush2.msra.mxu0 0.0
    %342 = vmatprep.subr.mxu0 0.0
    %343 = vmatpush2.msra.mxu0 0.0
    %344 = vmatprep.subr.mxu0 0.0
    %345 = vmatpush2.msra.mxu0 0.0
    %346 = vmatprep.subr.mxu0 0.0
    %347 = vmatpush2.msra.mxu0 0.0
    %348 = vmatprep.subr.mxu0 0.0
    %349 = vmatpush2.msra.mxu0 0.0
    %350 = vmatprep.subr.mxu0 0.0
    %351 = vmatpush2.msra.mxu0 0.0
    %352 = vmatprep.subr.mxu0 0.0
    %353 = vmatpush2.msra.mxu0 0.0
    %354 = vmatprep.subr.mxu0 0.0
    %355 = vmatpush2.msra.mxu0 0.0
    %356 = vmatprep.subr.mxu0 0.0
    %357 = vmatpush2.msra.mxu0 0.0
    %358 = vmatprep.subr.mxu0 0.0
    %359 = vmatpush2.msra.mxu0 0.0
    %360 = vmatprep.subr.mxu0 0.0
    %361 = vmatpush2.msra.mxu0 0.0
    %362 = vmatprep.subr.mxu0 0.0
    %363 = vmatpush2.msra.mxu0 0.0
    %364 = vmatprep.subr.mxu0 0.0
    %365 = vmatpush2.msra.mxu0 0.0
    %366 = vmatprep.subr.mxu0 0.0
    %367 = vmatpush2.msra.mxu0 0.0
    %368 = vmatprep.subr.mxu0 0.0
    %369 = vmatpush2.msra.mxu0 0.0
    %370 = vmatprep.mubr.f32.mxu0 0.0
    %371 = vmatmul.mubr.f32.gmra.mxu0 %v226
    %v372 = vpop.f32.mrf.mxu0
    %v373 = vadd.f32 %v298, %v372
    %v374 = vpop.f32.mrf.mxu0
    %375 = vmatprep.mubr.f32.mxu0 0.0
    %376 = vmatmul.mubr.f32.gmra.mxu0 %v227
    %v377 = vpop.f32.mrf.mxu0
    %v378 = vadd.f32 %v303, %v377
    %v379 = vpop.f32.mrf.mxu0
    %380 = vdwg.mxu0
    %v381 = vlaneseq
    %v382 = vshrl.u32 %v381, 7
    %v383 = vsub.s32 0, %v382
    %v384 = vrot.slane %v46, %v383
    %v385 = vadd.f32 %v373, %v384
    %v386 = vadd.f32 %v378, %v384
    %v387 = vmax.f32 %v385, 0.0
    %v388 = vmax.f32 %v386, 0.0
    %v389 = vlaneseq
    %v390 = vshrl.u32 %v389, 7
    %v391 = vsub.s32 0, %v390
    %v392 = vrot.slane %v51, %v391
    %vm393 = vcmask 261120
    %v395 = vsel %vm393, %v387, 0
    %v398 = vsel %vm393, %v388, 0
    %400 = vmatprep.subr.mxu0 0.0
    %401 = vmatpush1.msra.mxu0 0.0
    %402 = vmatprep.subr.mxu0 0.0
    %403 = vmatpush1.msra.mxu0 0.0
    %404 = vmatprep.subr.mxu0 0.0
    %405 = vmatpush1.msra.mxu0 0.0
    %406 = vmatprep.subr.mxu0 0.0
    %407 = vmatpush1.msra.mxu0 0.0
    %408 = vmatprep.subr.mxu0 0.0
    %409 = vmatpush1.msra.mxu0 0.0
    %410 = vmatprep.subr.mxu0 0.0
    %411 = vmatpush1.msra.mxu0 0.0
    %412 = vmatprep.subr.mxu0 0.0
    %413 = vmatpush1.msra.mxu0 0.0
    %414 = vmatprep.subr.mxu0 0.0
    %415 = vmatpush1.msra.mxu0 0.0
    %416 = vmatprep.subr.mxu0 0.0
    %417 = vmatpush1.msra.mxu0 0.0
    %418 = vmatprep.subr.mxu0 0.0
    %419 = vmatpush1.msra.mxu0 0.0
    %420 = vmatprep.subr.mxu0 0.0
    %421 = vmatpush1.msra.mxu0 0.0
    %422 = vmatprep.subr.mxu0 0.0
    %423 = vmatpush1.msra.mxu0 0.0
    %424 = vmatprep.subr.mxu0 0.0
    %425 = vmatpush1.msra.mxu0 %v50
    %426 = vmatprep.subr.mxu0 0.0
    %427 = vmatpush1.msra.mxu0 %v49
    %428 = vmatprep.subr.mxu0 0.0
    %429 = vmatpush1.msra.mxu0 %v48
    %430 = vmatprep.subr.mxu0 0.0
    %431 = vmatpush1.msra.mxu0 %v47
    %432 = vmatprep.subr.mxu0 0.0
    %433 = vmatpush2.msra.mxu0 0.0
    %434 = vmatprep.subr.mxu0 0.0
    %435 = vmatpush2.msra.mxu0 0.0
    %436 = vmatprep.subr.mxu0 0.0
    %437 = vmatpush2.msra.mxu0 0.0
    %438 = vmatprep.subr.mxu0 0.0
    %439 = vmatpush2.msra.mxu0 0.0
    %440 = vmatprep.subr.mxu0 0.0
    %441 = vmatpush2.msra.mxu0 0.0
    %442 = vmatprep.subr.mxu0 0.0
    %443 = vmatpush2.msra.mxu0 0.0
    %444 = vmatprep.subr.mxu0 0.0
    %445 = vmatpush2.msra.mxu0 0.0
    %446 = vmatprep.subr.mxu0 0.0
    %447 = vmatpush2.msra.mxu0 0.0
    %448 = vmatprep.subr.mxu0 0.0
    %449 = vmatpush2.msra.mxu0 0.0
    %450 = vmatprep.subr.mxu0 0.0
    %451 = vmatpush2.msra.mxu0 0.0
    %452 = vmatprep.subr.mxu0 0.0
    %453 = vmatpush2.msra.mxu0 0.0
    %454 = vmatprep.subr.mxu0 0.0
    %455 = vmatpush2.msra.mxu0 0.0
    %456 = vmatprep.subr.mxu0 0.0
    %457 = vmatpush2.msra.mxu0 0.0
    %458 = vmatprep.subr.mxu0 0.0
    %459 = vmatpush2.msra.mxu0 0.0
    %460 = vmatprep.subr.mxu0 0.0
    %461 = vmatpush2.msra.mxu0 0.0
    %462 = vmatprep.subr.mxu0 0.0
    %463 = vmatpush2.msra.mxu0 0.0
    %464 = vmatprep.mubr.f32.mxu0 0.0
    %465 = vmatmul.mubr.f32.gmra.mxu0 %v395
    %v466 = vpop.f32.mrf.mxu0
    %v467 = vadd.f32 %v392, %v466
    %v468 = vpop.f32.mrf.mxu0
    %469 = vmatprep.mubr.f32.mxu0 0.0
    %470 = vmatmul.mubr.f32.gmra.mxu0 %v398
    %v471 = vpop.f32.mrf.mxu0
    %v472 = vadd.f32 %v392, %v471
    %v473 = vpop.f32.mrf.mxu0
    %474 = vdwg.mxu0
    %475 = vst [vmem:[#allocation2] sm:$0xff] %v467
    %476 = vst [vmem:[#allocation2 + $0x8] sm:$0xff] %v472
    // Predicated region
    $region22: #{tpu_custom_call.1} parent=1 // pred_check
      _
    $region23: #{tpu_custom_call.1} parent=1 // pred_check_branch
      %478 = sbr.rel (0) target = $region25
    $region24: #{tpu_custom_call.1} parent=1 // pred_region
      %s480 = ssub.s32 256, 256
      %481 = vsyncadd [#allocation3], %s480
      %s482 = sshll.u32 [#allocation2], 4
      %s483 = int_to_ptr.vmem [resolvable:$true] %s482
      %488 = dma.vmem_to_hbm [thread:$0]  %s483, 256, %s5, [#allocation3], 128, 128, 8
    $region25: #{tpu_custom_call.1} parent=1 // pred_fallthru
      _
    // Predicated region
    $region26: #{tpu_custom_call.1} parent=1 // pred_check
      _
    $region27: #{tpu_custom_call.1} parent=1 // pred_check_branch
      %490 = sbr.rel (0) target = $region29
    $region28: #{tpu_custom_call.1} parent=1 // pred_region
      %491 = dma.done [#allocation3], 256
    $region29: #{tpu_custom_call.1} parent=1 // pred_fallthru
      _
    %492 = vsyncpa [#allocation3], 1

</llo_original>
